<compile_context>
chip_gen: v6e
topology: v6e:2x2x1
jax: 0.10.0
libtpu: 0.0.40
codegen_flags: <defaults>
</compile_context>

<pallas_src>
import jax
import jax.numpy as jnp
from jax import lax
from jax.experimental import pallas as pl
from jax.experimental.pallas import tpu as pltpu


def _round_up(x, m):
    return ((x + m - 1) // m) * m


def _cluster_kernel(h_ref, w_ref, b_ref, o_ref):
    # Linear: (tn, in_dims) x (out_p, in_dims) contracted on the in_dims axis of
    # both operands (PyTorch weight layout, transposed-RHS consumed by the MXU).
    logits = lax.dot_general(
        h_ref[...], w_ref[...],
        dimension_numbers=(((1,), (1,)), ((), ())),
        preferred_element_type=jnp.float32,
    ) + b_ref[...]                      # bias row broadcasts; padded lanes = -1e30

    # Numerically stable softmax over dim=1 (last axis).  Padded lanes carry a
    # -1e30 bias, so exp() drives them to exactly 0 and they never win the max.
    m = jnp.max(logits, axis=-1, keepdims=True)
    e = jnp.exp(logits - m)
    denom = jnp.sum(e, axis=-1, keepdims=True)
    o_ref[...] = (e * pl.reciprocal(denom, approx=True)).astype(o_ref.dtype)


def cluster_layer(h, weight, bias, *, block_n=1024):
    """h: (N, in_dims); weight: (out_dims, in_dims) (PyTorch layout); bias: (out_dims,)."""
    n, in_dims = h.shape
    out_dims = weight.shape[0]
    itemsize = jnp.dtype(h.dtype).itemsize

    # --- lane-dense padding of the output/feature axis (multiple of 128) -----
    out_p = _round_up(max(out_dims, 128), 128)
    w_p = weight
    if out_p != out_dims:
        w_p = jnp.zeros((out_p, in_dims), weight.dtype).at[:out_dims, :].set(weight)
    # Padded bias lanes get a huge negative so softmax assigns them zero mass.
    b_p = jnp.full((1, out_p), -1e30, dtype=jnp.float32)
    b_p = b_p.at[0, :out_dims].set(bias.astype(jnp.float32))

    # --- batch tile: dtype-aware sublane rounding, no host-side padding ------
    sub = 8 * (4 // itemsize)           # 8 rows f32, 16 bf16, 32 int8/fp8
    # Prefer >=2 grid steps (v7x megacore sharding of the "parallel" axis).
    tn = min(block_n, max(sub, _round_up(pl.cdiv(n, 2), sub)))
    grid = (pl.cdiv(n, tn),)

    # --- explicit scoped-VMEM budget ------------------------------------------
    # h (x2 buffers) + weight (single-buffered) + bias + out (x2 buffers)
    # + logits/e f32 temps + slack.
    vmem_bytes = (2 * tn * in_dims * itemsize
                  + out_p * in_dims * jnp.dtype(weight.dtype).itemsize
                  + out_p * 4
                  + 2 * tn * out_p * itemsize
                  + 2 * tn * out_p * 4
                  + (2 << 20))
    vmem_bytes = int(min(vmem_bytes, 100 * 1024 * 1024))

    cost = pl.CostEstimate(
        flops=2 * n * in_dims * out_p,
        transcendentals=n * out_p,                          # exp
        bytes_accessed=(n * in_dims * itemsize              # h
                        + out_p * in_dims * jnp.dtype(weight.dtype).itemsize
                        + out_p * 4                         # bias
                        + n * out_p * itemsize),            # output
    )

    out_arr = pl.pallas_call(
        _cluster_kernel,
        out_shape=jax.ShapeDtypeStruct((n, out_p), h.dtype),
        grid=grid,
        in_specs=[
            pl.BlockSpec((tn, in_dims), lambda i: (i, 0)),             # h tile
            pl.BlockSpec((out_p, in_dims), lambda i: (0, 0),
                         pipeline_mode=pl.Buffered(1)),                # weight, resident
            pl.BlockSpec((1, out_p), lambda i: (0, 0),
                         pipeline_mode=pl.Buffered(1)),                # bias,   resident
        ],
        out_specs=pl.BlockSpec((tn, out_p), lambda i: (i, 0)),
        compiler_params=pltpu.CompilerParams(
            dimension_semantics=("parallel",),
            vmem_limit_bytes=vmem_bytes),
        cost_estimate=cost,
    )(h, w_p, b_p)

    # Only the padded (exactly-zero-probability) feature lanes need trimming.
    if out_p != out_dims:
        out_arr = out_arr[:, :out_dims]
    return out_arr


if __name__ == "__main__":
    key = jax.random.PRNGKey(0)
    k_h, k_w, k_b = jax.random.split(key, 3)

    N, IN_DIMS, OUT_DIMS = 8, 32, 16

    # Deterministic parameter init mimicking nn.Linear default
    # (U[-1/sqrt(in_dims), 1/sqrt(in_dims)]).
    bound = 1.0 / jnp.sqrt(jnp.float32(IN_DIMS))
    weight = jax.random.uniform(k_w, (OUT_DIMS, IN_DIMS), jnp.float32,
                                minval=-bound, maxval=bound)
    bias = jax.random.uniform(k_b, (OUT_DIMS,), jnp.float32,
                              minval=-bound, maxval=bound)
    h = jax.random.normal(k_h, (N, IN_DIMS), jnp.float32)

    out = cluster_layer(h, weight, bias)
    jax.block_until_ready(out)

    # Pure-JAX reference check (approx reciprocal -> slightly looser tolerance).
    ref = jax.nn.softmax(h @ weight.T + bias, axis=1)
    assert out.shape == (N, OUT_DIMS)
    assert jnp.allclose(out, ref, atol=2e-3, rtol=2e-3), "mismatch vs reference"
    assert jnp.allclose(jnp.sum(out, axis=1), 1.0, atol=2e-3), "rows must sum to 1"

    print("KERNEL_OK")
</pallas_src>

<mosaic_0001>
module attributes {stable_mosaic.version = 11 : i64} {
  func.func @_cluster_kernel(%arg0: i32, %arg1: memref<8x32xf32, #tpu.memory_space<vmem>>, %arg2: memref<128x32xf32, #tpu.memory_space<vmem>>, %arg3: memref<1x128xf32, #tpu.memory_space<vmem>>, %arg4: memref<8x128xf32, #tpu.memory_space<vmem>>) attributes {dimension_semantics = [#tpu.dimension_semantics<parallel>], iteration_bounds = array<i64: 1>, scalar_prefetch = 0 : i64, scratch_operands = 0 : i64, tpu.core_type = #tpu.core_type<tc>, window_params = [{transform_indices = @transform_0, window_bounds = array<i64: 8, 32>}, {pipeline_mode = #tpu.pipeline_mode<synchronous>, transform_indices = @transform_1, window_bounds = array<i64: 128, 32>}, {pipeline_mode = #tpu.pipeline_mode<synchronous>, transform_indices = @transform_2, window_bounds = array<i64: 1, 128>}, {transform_indices = @transform_3, window_bounds = array<i64: 8, 128>}]} {
    %c0 = arith.constant 0 : index
    %c0_0 = arith.constant 0 : index
    %0 = vector.load %arg1[%c0, %c0_0] : memref<8x32xf32, #tpu.memory_space<vmem>>, vector<8x32xf32>
    %c0_1 = arith.constant 0 : index
    %c0_2 = arith.constant 0 : index
    %1 = vector.load %arg2[%c0_1, %c0_2] : memref<128x32xf32, #tpu.memory_space<vmem>>, vector<128x32xf32>
    %cst = arith.constant dense<0.000000e+00> : vector<8x128xf32>
    %2 = tpu.matmul %0, %1, %cst {dimension_numbers = #tpu.dot_dimension_numbers<[1], [1], [0], [0], [0, 0, 1, 0], [], []>} : vector<8x32xf32>, vector<128x32xf32>, vector<8x128xf32> -> vector<8x128xf32>
    %c0_3 = arith.constant 0 : index
    %c0_4 = arith.constant 0 : index
    %3 = vector.load %arg3[%c0_3, %c0_4] : memref<1x128xf32, #tpu.memory_space<vmem>>, vector<1x128xf32>
    %4 = vector.broadcast %3 : vector<1x128xf32> to vector<8x128xf32>
    %5 = arith.addf %2, %4 : vector<8x128xf32>
    %cst_5 = arith.constant dense<0xFF800000> : vector<8xf32>
    %6 = vector.multi_reduction <maximumf>, %5, %cst_5 [1] : vector<8x128xf32> to vector<8xf32>
    %7 = vector.shape_cast %6 : vector<8xf32> to vector<8x1xf32>
    %8 = vector.broadcast %7 : vector<8x1xf32> to vector<8x128xf32>
    %9 = arith.subf %5, %8 : vector<8x128xf32>
    %10 = math.exp %9 : vector<8x128xf32>
    %cst_6 = arith.constant dense<0.000000e+00> : vector<8xf32>
    %11 = vector.multi_reduction <add>, %10, %cst_6 [1] : vector<8x128xf32> to vector<8xf32>
    %12 = vector.shape_cast %11 : vector<8xf32> to vector<8x1xf32>
    %13 = tpu.reciprocal %12 {approx = true} : vector<8x1xf32> -> vector<8x1xf32>
    %14 = vector.broadcast %13 : vector<8x1xf32> to vector<8x128xf32>
    %15 = arith.mulf %10, %14 : vector<8x128xf32>
    %c0_7 = arith.constant 0 : index
    %c0_8 = arith.constant 0 : index
    %16 = vector.load %arg4[%c0_7, %c0_8] : memref<8x128xf32, #tpu.memory_space<vmem>>, vector<8x128xf32>
    tpu.vector_store %arg4[%c0_7, %c0_8], %15 {strides = array<i32>} : memref<8x128xf32, #tpu.memory_space<vmem>>, vector<8x128xf32>,
    return
  }
  func.func @transform_0(%arg0: i32) -> (i32, i32) {
    %c0_i32 = arith.constant 0 : i32
    %c0_i32_0 = arith.constant 0 : i32
    return %arg0, %c0_i32 : i32, i32
  }
  func.func @transform_1(%arg0: i32) -> (i32, i32) {
    %c0_i32 = arith.constant 0 : i32
    %c0_i32_0 = arith.constant 0 : i32
    %c0_i32_1 = arith.constant 0 : i32
    return %c0_i32, %c0_i32_0 : i32, i32
  }
  func.func @transform_2(%arg0: i32) -> (i32, i32) {
    %c0_i32 = arith.constant 0 : i32
    %c0_i32_0 = arith.constant 0 : i32
    %c0_i32_1 = arith.constant 0 : i32
    return %c0_i32, %c0_i32_0 : i32, i32
  }
  func.func @transform_3(%arg0: i32) -> (i32, i32) {
    %c0_i32 = arith.constant 0 : i32
    %c0_i32_0 = arith.constant 0 : i32
    return %arg0, %c0_i32 : i32, i32
  }
}

</mosaic_0001>

<llo_original>
// kernel: tpu_custom_call.1
$region0: #{tpu_custom_call.1}
  #allocation0 [shape = 'u32[]', space=smem, size = 0x4, offset = 0x4, fixed_abs, tag = 'smem constant byte address 0x4 - core index']
  #allocation1 [shape = 'u32[144,128]{1,0:T(1,128)}', space=vmem, size = 0x12000, scoped, tag = 'internal scratch']
  %s0 = inlined_call_operand.vmem [shape: f32[8,32], index: 0, kind: input, shape index: {}]
  %s1 = inlined_call_operand.vmem [shape: f32[128,32], index: 1, kind: input, shape index: {}]
  %s2 = inlined_call_operand.vmem [shape: f32[1,128], index: 2, kind: input, shape index: {}]
  %s3 = inlined_call_operand.hbm [shape: f32[8,128], index: 3, kind: output, shape index: {}]
  %s4 = sld [smem:[#allocation0]]
  $region22: #{tpu_custom_call.1} parent=0
    _
  %s6 = ssub.s32 1, %s4
  %s7 = scalar_select 0, %s6, %s4
  $region1: #{tpu_custom_call.1} parent=0
    #allocation2 [shape = 'u8[4096]{0}', space=vmem, size = 0x1000, scoped, tag = 'output window, operand 0, single buffered']
    #allocation3 [shape = 's32[1]{0}', space=sflag, size = 0x4, scoped, tag = 'scoped memory for tpu_custom_call.1']
    %8 = vsyncpa [#allocation3], 0
    // Predicated region
    $region2: #{tpu_custom_call.1} parent=1 // pred_check
      _
    $region3: #{tpu_custom_call.1} parent=1 // pred_check_branch
      %10 = sbr.rel (0) target = $region5
    $region4: #{tpu_custom_call.1} parent=1 // pred_region
      _
    $region5: #{tpu_custom_call.1} parent=1 // pred_fallthru
      _
    // Predicated region
    $region6: #{tpu_custom_call.1} parent=1 // pred_check
      _
    $region7: #{tpu_custom_call.1} parent=1 // pred_check_branch
      %12 = sbr.rel (0) target = $region9
    $region8: #{tpu_custom_call.1} parent=1 // pred_region
      _
    $region9: #{tpu_custom_call.1} parent=1 // pred_fallthru
      _
    // Predicated region
    $region10: #{tpu_custom_call.1} parent=1 // pred_check
      _
    $region11: #{tpu_custom_call.1} parent=1 // pred_check_branch
      %14 = sbr.rel (0) target = $region13
    $region12: #{tpu_custom_call.1} parent=1 // pred_region
      _
    $region13: #{tpu_custom_call.1} parent=1 // pred_fallthru
      _
    %v15 = vld [vmem:[%s0] sm:$0xff]
    %v16 = vld [vmem:[%s1] sm:$0xff]
    %v17 = vld [vmem:[%s1 + $0x8] sm:$0xff]
    %v18 = vld [vmem:[%s1 + $0x10] sm:$0xff]
    %v19 = vld [vmem:[%s1 + $0x18] sm:$0xff]
    %v20 = vld [vmem:[%s1 + $0x20] sm:$0xff]
    %v21 = vld [vmem:[%s1 + $0x28] sm:$0xff]
    %v22 = vld [vmem:[%s1 + $0x30] sm:$0xff]
    %v23 = vld [vmem:[%s1 + $0x38] sm:$0xff]
    %v24 = vld [vmem:[%s1 + $0x40] sm:$0xff]
    %v25 = vld [vmem:[%s1 + $0x48] sm:$0xff]
    %v26 = vld [vmem:[%s1 + $0x50] sm:$0xff]
    %v27 = vld [vmem:[%s1 + $0x58] sm:$0xff]
    %v28 = vld [vmem:[%s1 + $0x60] sm:$0xff]
    %v29 = vld [vmem:[%s1 + $0x68] sm:$0xff]
    %v30 = vld [vmem:[%s1 + $0x70] sm:$0xff]
    %v31 = vld [vmem:[%s1 + $0x78] sm:$0xff]
    %v32 = vld [vmem:[%s2] sm:$0x1]
    %v34 = vlaneseq
    %v35 = vshrl.u32 %v34, 7
    %v36 = vsub.s32 0, %v35
    %v37 = vrot.slane %v32, %v36
    %vm39 = vcmask 261120
    %v41 = vsel %vm39, %v15, 0
    %v44 = vsel %vm39, %v16, 0
    %v47 = vsel %vm39, %v17, 0
    %v50 = vsel %vm39, %v18, 0
    %v53 = vsel %vm39, %v19, 0
    %v56 = vsel %vm39, %v20, 0
    %v59 = vsel %vm39, %v21, 0
    %v62 = vsel %vm39, %v22, 0
    %v65 = vsel %vm39, %v23, 0
    %v68 = vsel %vm39, %v24, 0
    %v71 = vsel %vm39, %v25, 0
    %v74 = vsel %vm39, %v26, 0
    %v77 = vsel %vm39, %v27, 0
    %v80 = vsel %vm39, %v28, 0
    %v83 = vsel %vm39, %v29, 0
    %v86 = vsel %vm39, %v30, 0
    %v89 = vsel %vm39, %v31, 0
    %91 = vmatprep.subr.mxu0 0.0
    %92 = vmatpush1.xpose.msra.mxu0 %v89
    %93 = vmatprep.subr.mxu0 0.0
    %94 = vmatpush1.xpose.msra.mxu0 %v86
    %95 = vmatprep.subr.mxu0 0.0
    %96 = vmatpush1.xpose.msra.mxu0 %v83
    %97 = vmatprep.subr.mxu0 0.0
    %98 = vmatpush1.xpose.msra.mxu0 %v80
    %99 = vmatprep.subr.mxu0 0.0
    %100 = vmatpush1.xpose.msra.mxu0 %v77
    %101 = vmatprep.subr.mxu0 0.0
    %102 = vmatpush1.xpose.msra.mxu0 %v74
    %103 = vmatprep.subr.mxu0 0.0
    %104 = vmatpush1.xpose.msra.mxu0 %v71
    %105 = vmatprep.subr.mxu0 0.0
    %106 = vmatpush1.xpose.msra.mxu0 %v68
    %107 = vmatprep.subr.mxu0 0.0
    %108 = vmatpush1.xpose.msra.mxu0 %v65
    %109 = vmatprep.subr.mxu0 0.0
    %110 = vmatpush1.xpose.msra.mxu0 %v62
    %111 = vmatprep.subr.mxu0 0.0
    %112 = vmatpush1.xpose.msra.mxu0 %v59
    %113 = vmatprep.subr.mxu0 0.0
    %114 = vmatpush1.xpose.msra.mxu0 %v56
    %115 = vmatprep.subr.mxu0 0.0
    %116 = vmatpush1.xpose.msra.mxu0 %v53
    %117 = vmatprep.subr.mxu0 0.0
    %118 = vmatpush1.xpose.msra.mxu0 %v50
    %119 = vmatprep.subr.mxu0 0.0
    %120 = vmatpush1.xpose.msra.mxu0 %v47
    %121 = vmatprep.subr.mxu0 0.0
    %122 = vmatpush1.xpose.msra.mxu0 %v44
    %123 = vmatprep.subr.mxu0 0.0
    %124 = vmatpush2.xpose.msra.mxu0 0.0
    %125 = vmatprep.subr.mxu0 0.0
    %126 = vmatpush2.xpose.msra.mxu0 0.0
    %127 = vmatprep.subr.mxu0 0.0
    %128 = vmatpush2.xpose.msra.mxu0 0.0
    %129 = vmatprep.subr.mxu0 0.0
    %130 = vmatpush2.xpose.msra.mxu0 0.0
    %131 = vmatprep.subr.mxu0 0.0
    %132 = vmatpush2.xpose.msra.mxu0 0.0
    %133 = vmatprep.subr.mxu0 0.0
    %134 = vmatpush2.xpose.msra.mxu0 0.0
    %135 = vmatprep.subr.mxu0 0.0
    %136 = vmatpush2.xpose.msra.mxu0 0.0
    %137 = vmatprep.subr.mxu0 0.0
    %138 = vmatpush2.xpose.msra.mxu0 0.0
    %139 = vmatprep.subr.mxu0 0.0
    %140 = vmatpush2.xpose.msra.mxu0 0.0
    %141 = vmatprep.subr.mxu0 0.0
    %142 = vmatpush2.xpose.msra.mxu0 0.0
    %143 = vmatprep.subr.mxu0 0.0
    %144 = vmatpush2.xpose.msra.mxu0 0.0
    %145 = vmatprep.subr.mxu0 0.0
    %146 = vmatpush2.xpose.msra.mxu0 0.0
    %147 = vmatprep.subr.mxu0 0.0
    %148 = vmatpush2.xpose.msra.mxu0 0.0
    %149 = vmatprep.subr.mxu0 0.0
    %150 = vmatpush2.xpose.msra.mxu0 0.0
    %151 = vmatprep.subr.mxu0 0.0
    %152 = vmatpush2.xpose.msra.mxu0 0.0
    %153 = vmatprep.subr.mxu0 0.0
    %154 = vmatpush2.xpose.msra.mxu0 0.0
    %155 = vmatprep.mubr.f32.mxu0 0.0
    %156 = vmatmul.mubr.f32.gmra.mxu0 %v41
    %v157 = vpop.f32.mrf.mxu0
    %v158 = vadd.f32 %v37, %v157
    %v159 = vpop.f32.mrf.mxu0
    %160 = vdwg.mxu0
    %161 = vmax.xlane.f32.xlu0 %v158
    %v162 = vpop.xlane.xlu0 %161
    %v163 = vsub.f32 %v158, %v162
    %v164 = vmul.f32 %v163, 1.442695
    %v165 = vpow.pop %v164
    %166 = vadd.xlane.f32.xlu0 %v165
    %v167 = vpop.xlane.xlu0 %166
    %v168 = vrcp.pop %v167
    %v169 = vmul.f32 %v165, %v168
    %170 = vst [vmem:[#allocation2] sm:$0xff] %v169
    // Predicated region
    $region14: #{tpu_custom_call.1} parent=1 // pred_check
      _
    $region15: #{tpu_custom_call.1} parent=1 // pred_check_branch
      %172 = sbr.rel (0) target = $region17
    $region16: #{tpu_custom_call.1} parent=1 // pred_region
      %s174 = ssub.s32 128, 128
      %175 = vsyncadd [#allocation3], %s174
      %s177 = sshll.u32 [#allocation2], 4
      %s178 = int_to_ptr.vmem [resolvable:$true] %s177
      %180 = dma.vmem_to_hbm [thread:$0]  %s178, 128, %s3, [#allocation3]
    $region17: #{tpu_custom_call.1} parent=1 // pred_fallthru
      _
    // Predicated region
    $region18: #{tpu_custom_call.1} parent=1 // pred_check
      _
    $region19: #{tpu_custom_call.1} parent=1 // pred_check_branch
      %182 = sbr.rel (0) target = $region21
    $region20: #{tpu_custom_call.1} parent=1 // pred_region
      %183 = dma.done [#allocation3], 128
    $region21: #{tpu_custom_call.1} parent=1 // pred_fallthru
      _
    %184 = vsyncpa [#allocation3], 1

</llo_original>
